<compile_context>
chip_gen: v6e
topology: v6e:2x2x1
jax: 0.10.0
libtpu: 0.0.40
codegen_flags: <defaults>
</compile_context>

<pallas_src>
import jax
import jax.numpy as jnp
from jax import lax
from jax.experimental import pallas as pl
from jax.experimental.pallas import tpu as pltpu

_LANE = 128      # vreg lane width
_SUBLANE = 8     # f32 sublanes per vreg


def _round_up(x, m):
    return (x + m - 1) // m * m


def _scale_terms(d_pad, h_valid, w_valid):
    """d_pad: (Hp, Wp) f32, zero everywhere outside [0,h_valid) x [0,w_valid).

    Returns (sum|d|, sum |dx|+|dy|) as (1,1) f32, with dx/dy the central
    differences of the *logical* image under zero padding (== conv2d with the
    fixed dx/dy filters, padding=1).
    """
    Hp, Wp = d_pad.shape
    abs_sum = jnp.sum(jnp.abs(d_pad), keepdims=True)           # pads are zero

    w_idx = lax.broadcasted_iota(jnp.int32, (Hp, Wp), 1)
    h_idx = lax.broadcasted_iota(jnp.int32, (Hp, Wp), 0)

    # Circular rolls; non-negative shifts only (shift=size-1 == shift=-1).
    # Because Hp >= h_valid+1 and Wp >= w_valid+1, the wrap-around always lands
    # in zero padding inside the valid region, so only a single "kill the pad
    # rows/cols" mask per direction is needed and |dx|, |dy| do not depend on
    # the rotation direction convention.
    a = pltpu.roll(d_pad, shift=1, axis=1)           # one lane neighbor
    b = pltpu.roll(d_pad, shift=Wp - 1, axis=1)      # the other lane neighbor
    c = pltpu.roll(d_pad, shift=1, axis=0)           # one sublane neighbor
    e = pltpu.roll(d_pad, shift=Hp - 1, axis=0)      # the other sublane neighbor

    dx_abs = jnp.where(w_idx < w_valid, jnp.abs(0.5 * (b - a)), 0.0)
    dy_abs = jnp.where(h_idx < h_valid, jnp.abs(0.5 * (e - c)), 0.0)

    grad_sum = jnp.sum(dx_abs + dy_abs, keepdims=True)
    return abs_sum, grad_sum


def _make_fused_kernel(num_scales, b_tile, logical_hw, weights):
    """All scales fused; one batch tile per grid step; weighted scalar out."""
    def kernel(*refs):
        in_refs = refs[:2 * num_scales]
        out_ref = refs[2 * num_scales]

        total = jnp.zeros((1, 1), jnp.float32)
        for s in range(num_scales):
            pred_ref = in_refs[2 * s]
            gt_ref = in_refs[2 * s + 1]
            h_valid, w_valid = logical_hw[s]
            abs_w, grad_w = weights[s]
            for i in range(b_tile):                 # unrolled: no grid-step cost
                d = (pred_ref[i].astype(jnp.float32)
                     - gt_ref[i].astype(jnp.float32))
                a_sum, g_sum = _scale_terms(d, h_valid, w_valid)
                total = total + jnp.float32(abs_w) * a_sum
                total = total + jnp.float32(grad_w) * g_sum

        # Lane-dense full-block store; each grid step owns its own block
        # (race-free under "parallel" semantics, no RMW accumulator).
        out_ref[...] = jnp.broadcast_to(total, out_ref.shape)
    return kernel


def _choose_batch_tile(batch, padded_hw, itemsizes):
    """Largest divisor of `batch` that keeps per-step blocks small (fits the
    default scoped-VMEM budget with double buffering on v5e/v6e/v7x) while
    leaving >=2 grid steps so a v7x megacore can split the parallel axis."""
    bytes_per_elem = sum(2 * h * w * isz
                         for (h, w), isz in zip(padded_hw, itemsizes))
    budget = 4 * 1024 * 1024                  # per-step block bytes (x2 buffers)
    cap = max(1, budget // max(bytes_per_elem, 1))
    cap = min(cap, 8)                         # bound the in-kernel unroll
    if batch >= 2:
        cap = min(cap, batch // 2)            # keep at least two grid steps
    cap = max(cap, 1)
    b_tile = 1
    for c in range(1, min(batch, cap) + 1):
        if batch % c == 0:
            b_tile = c
    return b_tile


def multi_scale_l2_loss(pred_list, gt, gt_ds, alpha_list, beta_list):
    """Equivalent of MultiScaleL2Loss.forward. Inputs are NCHW with C == 1."""
    num_scales = len(pred_list)
    inputs, in_specs = [], []
    padded_hw, logical_hw, weights, itemsizes = [], [], [], []

    batch = pred_list[0].shape[0]
    for i, pred in enumerate(pred_list):
        depth_gt = gt if i == 0 else gt_ds
        assert pred.shape[1] == 1 and depth_gt.shape[1] == 1, (
            "SquaredGradientLoss' (1,1,3,3) depthwise filters require C == 1")
        assert pred.shape[0] == batch and depth_gt.shape[0] == batch

        p = jnp.squeeze(pred, axis=1)             # (B, H, W), native dtype
        g = jnp.squeeze(depth_gt, axis=1)
        B, H, W = p.shape
        # >= one extra pad row/col, rounded up to vreg tiling (8, 128).
        Hp = _round_up(H + 1, _SUBLANE)
        Wp = _round_up(W + 1, _LANE)
        p = jnp.pad(p, ((0, 0), (0, Hp - H), (0, Wp - W)))
        g = jnp.pad(g, ((0, 0), (0, Hp - H), (0, Wp - W)))

        inputs.extend([p, g])
        padded_hw.append((Hp, Wp))
        logical_hw.append((H, W))
        itemsizes.append(max(p.dtype.itemsize, g.dtype.itemsize))
        # alpha * mean(|.|) == (alpha / numel) * sum(|.|);  beta * sum(.)/1e4
        weights.append((float(alpha_list[i]) / float(B * H * W),
                        float(beta_list[i]) / 10000.0))

    b_tile = _choose_batch_tile(batch, padded_hw, itemsizes)
    num_tiles = batch // b_tile

    for s in range(num_scales):
        Hp, Wp = padded_hw[s]
        spec = pl.BlockSpec((b_tile, Hp, Wp), lambda b: (b, 0, 0))
        in_specs.extend([spec, spec])             # pred_s, gt_s

    kernel = _make_fused_kernel(num_scales, b_tile, logical_hw, weights)

    partials = pl.pallas_call(
        kernel,
        out_shape=jax.ShapeDtypeStruct((num_tiles, _SUBLANE, _LANE),
                                       jnp.float32),
        grid_spec=pltpu.PrefetchScalarGridSpec(
            num_scalar_prefetch=0,
            grid=(num_tiles,),
            in_specs=in_specs,
            out_specs=pl.BlockSpec((1, _SUBLANE, _LANE), lambda b: (b, 0, 0)),
        ),
        compiler_params=pltpu.CompilerParams(
            dimension_semantics=("parallel",)),   # megacore-splittable on v7x
    )(*inputs)

    return jnp.sum(partials[:, 0, 0])


def _reference_loss(pred_list, gt, gt_ds, alpha_list, beta_list):
    """Pure-JAX reference reproducing the PyTorch semantics."""
    def grads(x):  # x: (B, H, W)
        xp = jnp.pad(x, ((0, 0), (1, 1), (1, 1)))
        dx = 0.5 * (xp[:, 1:-1, 2:] - xp[:, 1:-1, :-2])
        dy = 0.5 * (xp[:, 2:, 1:-1] - xp[:, :-2, 1:-1])
        return dx, dy

    total = jnp.float32(0.0)
    for i, pred in enumerate(pred_list):
        depth_gt = gt if i == 0 else gt_ds
        p = jnp.squeeze(pred, axis=1).astype(jnp.float32)
        g = jnp.squeeze(depth_gt, axis=1).astype(jnp.float32)
        total = total + alpha_list[i] * jnp.mean(jnp.abs(p - g))
        dxp, dyp = grads(p)
        dxg, dyg = grads(g)
        total = total + beta_list[i] * jnp.sum(
            jnp.abs(dxp - dxg) + jnp.abs(dyp - dyg)) / 10000.0
    return total


if __name__ == "__main__":
    key = jax.random.PRNGKey(0)
    k0, k1, k2, k3 = jax.random.split(key, 4)

    B, C, H, W = 2, 1, 16, 16           # full-resolution scale
    Hd, Wd = H // 2, W // 2             # downsampled scale

    pred0 = jax.random.normal(k0, (B, C, H, W), jnp.float32)
    pred1 = jax.random.normal(k1, (B, C, Hd, Wd), jnp.float32)
    gt = jax.random.normal(k2, (B, C, H, W), jnp.float32)
    gt_ds = jax.random.normal(k3, (B, C, Hd, Wd), jnp.float32)

    alpha_list = [1.0, 0.5]
    beta_list = [0.1, 0.05]

    out = multi_scale_l2_loss([pred0, pred1], gt, gt_ds, alpha_list, beta_list)
    out = jax.block_until_ready(out)

    ref = _reference_loss([pred0, pred1], gt, gt_ds, alpha_list, beta_list)
    assert jnp.allclose(out, ref, rtol=1e-5, atol=1e-5), (out, ref)

    print("KERNEL_OK")
</pallas_src>

<mosaic_0001>
module attributes {stable_mosaic.version = 11 : i64} {
  func.func @kernel(%arg0: i32, %arg1: memref<1x24x128xf32, #tpu.memory_space<vmem>>, %arg2: memref<1x24x128xf32, #tpu.memory_space<vmem>>, %arg3: memref<1x16x128xf32, #tpu.memory_space<vmem>>, %arg4: memref<1x16x128xf32, #tpu.memory_space<vmem>>, %arg5: memref<1x8x128xf32, #tpu.memory_space<vmem>>) attributes {dimension_semantics = [#tpu.dimension_semantics<parallel>], iteration_bounds = array<i64: 2>, scalar_prefetch = 0 : i64, scratch_operands = 0 : i64, tpu.core_type = #tpu.core_type<tc>, window_params = [{transform_indices = @transform_0, window_bounds = array<i64: 1, 24, 128>}, {transform_indices = @transform_1, window_bounds = array<i64: 1, 24, 128>}, {transform_indices = @transform_2, window_bounds = array<i64: 1, 16, 128>}, {transform_indices = @transform_3, window_bounds = array<i64: 1, 16, 128>}, {transform_indices = @transform_4, window_bounds = array<i64: 1, 8, 128>}]} {
    %cst = arith.constant 0.000000e+00 : f32
    %0 = vector.broadcast %cst : f32 to vector<1x1xf32>
    %c0 = arith.constant 0 : index
    %c0_0 = arith.constant 0 : index
    %c0_1 = arith.constant 0 : index
    %1 = vector.load %arg1[%c0, %c0_0, %c0_1] : memref<1x24x128xf32, #tpu.memory_space<vmem>>, vector<1x24x128xf32>
    %2 = vector.shape_cast %1 : vector<1x24x128xf32> to vector<24x128xf32>
    %c0_2 = arith.constant 0 : index
    %c0_3 = arith.constant 0 : index
    %c0_4 = arith.constant 0 : index
    %3 = vector.load %arg2[%c0_2, %c0_3, %c0_4] : memref<1x24x128xf32, #tpu.memory_space<vmem>>, vector<1x24x128xf32>
    %4 = vector.shape_cast %3 : vector<1x24x128xf32> to vector<24x128xf32>
    %5 = arith.subf %2, %4 : vector<24x128xf32>
    %6 = math.absf %5 : vector<24x128xf32>
    %7 = vector.shape_cast %6 : vector<24x128xf32> to vector<1x24x128xf32>
    %cst_5 = arith.constant dense<0.000000e+00> : vector<1xf32>
    %8 = vector.multi_reduction <add>, %7, %cst_5 [1, 2] : vector<1x24x128xf32> to vector<1xf32>
    %9 = vector.shape_cast %8 : vector<1xf32> to vector<1x1x1xf32>
    %10 = vector.extract %9[0, 0, 0] : f32 from vector<1x1x1xf32>
    %11 = vector.broadcast %10 : f32 to vector<1x1xf32>
    %12 = tpu.iota {dimensions = array<i32: 1>} : vector<24x128xi32>
    %13 = tpu.iota {dimensions = array<i32: 0>} : vector<24x128xi32>
    %c1_i32 = arith.constant 1 : i32
    %14 = tpu.dynamic_rotate %5 by %c1_i32 dim 1 : vector<24x128xf32>, i32 -> vector<24x128xf32>
    %c127_i32 = arith.constant 127 : i32
    %15 = tpu.dynamic_rotate %5 by %c127_i32 dim 1 : vector<24x128xf32>, i32 -> vector<24x128xf32>
    %c1_i32_6 = arith.constant 1 : i32
    %16 = tpu.dynamic_rotate %5 by %c1_i32_6 dim 0 : vector<24x128xf32>, i32 -> vector<24x128xf32>
    %c23_i32 = arith.constant 23 : i32
    %17 = tpu.dynamic_rotate %5 by %c23_i32 dim 0 : vector<24x128xf32>, i32 -> vector<24x128xf32>
    %c16_i32 = arith.constant 16 : i32
    %18 = vector.broadcast %c16_i32 : i32 to vector<24x128xi32>
    %19 = arith.cmpi slt, %12, %18 : vector<24x128xi32>
    %20 = arith.subf %15, %14 : vector<24x128xf32>
    %cst_7 = arith.constant 5.000000e-01 : f32
    %21 = vector.broadcast %cst_7 : f32 to vector<24x128xf32>
    %22 = arith.mulf %21, %20 : vector<24x128xf32>
    %23 = math.absf %22 : vector<24x128xf32>
    %cst_8 = arith.constant 0.000000e+00 : f32
    %24 = vector.broadcast %cst_8 : f32 to vector<24x128xf32>
    %25 = arith.select %19, %23, %24 : vector<24x128xi1>, vector<24x128xf32>
    %c16_i32_9 = arith.constant 16 : i32
    %26 = vector.broadcast %c16_i32_9 : i32 to vector<24x128xi32>
    %27 = arith.cmpi slt, %13, %26 : vector<24x128xi32>
    %28 = arith.subf %17, %16 : vector<24x128xf32>
    %cst_10 = arith.constant 5.000000e-01 : f32
    %29 = vector.broadcast %cst_10 : f32 to vector<24x128xf32>
    %30 = arith.mulf %29, %28 : vector<24x128xf32>
    %31 = math.absf %30 : vector<24x128xf32>
    %cst_11 = arith.constant 0.000000e+00 : f32
    %32 = vector.broadcast %cst_11 : f32 to vector<24x128xf32>
    %33 = arith.select %27, %31, %32 : vector<24x128xi1>, vector<24x128xf32>
    %34 = arith.addf %25, %33 : vector<24x128xf32>
    %35 = vector.shape_cast %34 : vector<24x128xf32> to vector<1x24x128xf32>
    %cst_12 = arith.constant dense<0.000000e+00> : vector<1xf32>
    %36 = vector.multi_reduction <add>, %35, %cst_12 [1, 2] : vector<1x24x128xf32> to vector<1xf32>
    %37 = vector.shape_cast %36 : vector<1xf32> to vector<1x1x1xf32>
    %38 = vector.extract %37[0, 0, 0] : f32 from vector<1x1x1xf32>
    %39 = vector.broadcast %38 : f32 to vector<1x1xf32>
    %cst_13 = arith.constant 0.001953125 : f32
    %40 = vector.broadcast %cst_13 : f32 to vector<1x1xf32>
    %41 = arith.mulf %40, %11 : vector<1x1xf32>
    %42 = arith.addf %0, %41 : vector<1x1xf32>
    %cst_14 = arith.constant 9.99999974E-6 : f32
    %43 = vector.broadcast %cst_14 : f32 to vector<1x1xf32>
    %44 = arith.mulf %43, %39 : vector<1x1xf32>
    %45 = arith.addf %42, %44 : vector<1x1xf32>
    %c0_15 = arith.constant 0 : index
    %c0_16 = arith.constant 0 : index
    %c0_17 = arith.constant 0 : index
    %46 = vector.load %arg3[%c0_15, %c0_16, %c0_17] : memref<1x16x128xf32, #tpu.memory_space<vmem>>, vector<1x16x128xf32>
    %47 = vector.shape_cast %46 : vector<1x16x128xf32> to vector<16x128xf32>
    %c0_18 = arith.constant 0 : index
    %c0_19 = arith.constant 0 : index
    %c0_20 = arith.constant 0 : index
    %48 = vector.load %arg4[%c0_18, %c0_19, %c0_20] : memref<1x16x128xf32, #tpu.memory_space<vmem>>, vector<1x16x128xf32>
    %49 = vector.shape_cast %48 : vector<1x16x128xf32> to vector<16x128xf32>
    %50 = arith.subf %47, %49 : vector<16x128xf32>
    %51 = math.absf %50 : vector<16x128xf32>
    %52 = vector.shape_cast %51 : vector<16x128xf32> to vector<1x16x128xf32>
    %cst_21 = arith.constant dense<0.000000e+00> : vector<1xf32>
    %53 = vector.multi_reduction <add>, %52, %cst_21 [1, 2] : vector<1x16x128xf32> to vector<1xf32>
    %54 = vector.shape_cast %53 : vector<1xf32> to vector<1x1x1xf32>
    %55 = vector.extract %54[0, 0, 0] : f32 from vector<1x1x1xf32>
    %56 = vector.broadcast %55 : f32 to vector<1x1xf32>
    %57 = tpu.iota {dimensions = array<i32: 1>} : vector<16x128xi32>
    %58 = tpu.iota {dimensions = array<i32: 0>} : vector<16x128xi32>
    %c1_i32_22 = arith.constant 1 : i32
    %59 = tpu.dynamic_rotate %50 by %c1_i32_22 dim 1 : vector<16x128xf32>, i32 -> vector<16x128xf32>
    %c127_i32_23 = arith.constant 127 : i32
    %60 = tpu.dynamic_rotate %50 by %c127_i32_23 dim 1 : vector<16x128xf32>, i32 -> vector<16x128xf32>
    %c1_i32_24 = arith.constant 1 : i32
    %61 = tpu.dynamic_rotate %50 by %c1_i32_24 dim 0 : vector<16x128xf32>, i32 -> vector<16x128xf32>
    %c15_i32 = arith.constant 15 : i32
    %62 = tpu.dynamic_rotate %50 by %c15_i32 dim 0 : vector<16x128xf32>, i32 -> vector<16x128xf32>
    %c8_i32 = arith.constant 8 : i32
    %63 = vector.broadcast %c8_i32 : i32 to vector<16x128xi32>
    %64 = arith.cmpi slt, %57, %63 : vector<16x128xi32>
    %65 = arith.subf %60, %59 : vector<16x128xf32>
    %cst_25 = arith.constant 5.000000e-01 : f32
    %66 = vector.broadcast %cst_25 : f32 to vector<16x128xf32>
    %67 = arith.mulf %66, %65 : vector<16x128xf32>
    %68 = math.absf %67 : vector<16x128xf32>
    %cst_26 = arith.constant 0.000000e+00 : f32
    %69 = vector.broadcast %cst_26 : f32 to vector<16x128xf32>
    %70 = arith.select %64, %68, %69 : vector<16x128xi1>, vector<16x128xf32>
    %c8_i32_27 = arith.constant 8 : i32
    %71 = vector.broadcast %c8_i32_27 : i32 to vector<16x128xi32>
    %72 = arith.cmpi slt, %58, %71 : vector<16x128xi32>
    %73 = arith.subf %62, %61 : vector<16x128xf32>
    %cst_28 = arith.constant 5.000000e-01 : f32
    %74 = vector.broadcast %cst_28 : f32 to vector<16x128xf32>
    %75 = arith.mulf %74, %73 : vector<16x128xf32>
    %76 = math.absf %75 : vector<16x128xf32>
    %cst_29 = arith.constant 0.000000e+00 : f32
    %77 = vector.broadcast %cst_29 : f32 to vector<16x128xf32>
    %78 = arith.select %72, %76, %77 : vector<16x128xi1>, vector<16x128xf32>
    %79 = arith.addf %70, %78 : vector<16x128xf32>
    %80 = vector.shape_cast %79 : vector<16x128xf32> to vector<1x16x128xf32>
    %cst_30 = arith.constant dense<0.000000e+00> : vector<1xf32>
    %81 = vector.multi_reduction <add>, %80, %cst_30 [1, 2] : vector<1x16x128xf32> to vector<1xf32>
    %82 = vector.shape_cast %81 : vector<1xf32> to vector<1x1x1xf32>
    %83 = vector.extract %82[0, 0, 0] : f32 from vector<1x1x1xf32>
    %84 = vector.broadcast %83 : f32 to vector<1x1xf32>
    %cst_31 = arith.constant 3.906250e-03 : f32
    %85 = vector.broadcast %cst_31 : f32 to vector<1x1xf32>
    %86 = arith.mulf %85, %56 : vector<1x1xf32>
    %87 = arith.addf %45, %86 : vector<1x1xf32>
    %cst_32 = arith.constant 5.000000e-06 : f32
    %88 = vector.broadcast %cst_32 : f32 to vector<1x1xf32>
    %89 = arith.mulf %88, %84 : vector<1x1xf32>
    %90 = arith.addf %87, %89 : vector<1x1xf32>
    %91 = vector.shape_cast %90 : vector<1x1xf32> to vector<1x1x1xf32>
    %92 = vector.broadcast %91 : vector<1x1x1xf32> to vector<1x8x128xf32>
    %c0_33 = arith.constant 0 : index
    %c0_34 = arith.constant 0 : index
    %c0_35 = arith.constant 0 : index
    %93 = vector.load %arg5[%c0_33, %c0_34, %c0_35] : memref<1x8x128xf32, #tpu.memory_space<vmem>>, vector<1x8x128xf32>
    tpu.vector_store %arg5[%c0_33, %c0_34, %c0_35], %92 {strides = array<i32>} : memref<1x8x128xf32, #tpu.memory_space<vmem>>, vector<1x8x128xf32>,
    return
  }
  func.func @transform_0(%arg0: i32) -> (i32, i32, i32) {
    %c0_i32 = arith.constant 0 : i32
    %c0_i32_0 = arith.constant 0 : i32
    %c0_i32_1 = arith.constant 0 : i32
    return %arg0, %c0_i32, %c0_i32_0 : i32, i32, i32
  }
  func.func @transform_1(%arg0: i32) -> (i32, i32, i32) {
    %c0_i32 = arith.constant 0 : i32
    %c0_i32_0 = arith.constant 0 : i32
    %c0_i32_1 = arith.constant 0 : i32
    return %arg0, %c0_i32, %c0_i32_0 : i32, i32, i32
  }
  func.func @transform_2(%arg0: i32) -> (i32, i32, i32) {
    %c0_i32 = arith.constant 0 : i32
    %c0_i32_0 = arith.constant 0 : i32
    %c0_i32_1 = arith.constant 0 : i32
    return %arg0, %c0_i32, %c0_i32_0 : i32, i32, i32
  }
  func.func @transform_3(%arg0: i32) -> (i32, i32, i32) {
    %c0_i32 = arith.constant 0 : i32
    %c0_i32_0 = arith.constant 0 : i32
    %c0_i32_1 = arith.constant 0 : i32
    return %arg0, %c0_i32, %c0_i32_0 : i32, i32, i32
  }
  func.func @transform_4(%arg0: i32) -> (i32, i32, i32) {
    %c0_i32 = arith.constant 0 : i32
    %c0_i32_0 = arith.constant 0 : i32
    %c0_i32_1 = arith.constant 0 : i32
    return %arg0, %c0_i32, %c0_i32_0 : i32, i32, i32
  }
}

</mosaic_0001>

<llo_original>
// kernel: tpu_custom_call.1
$region0: #{tpu_custom_call.1}
  #allocation0 [shape = 'u32[]', space=smem, size = 0x4, offset = 0x4, fixed_abs, tag = 'smem constant byte address 0x4 - core index']
  #allocation1 [shape = 'u32[144,128]{1,0:T(1,128)}', space=vmem, size = 0x12000, scoped, tag = 'internal scratch']
  %s0 = inlined_call_operand.hbm [shape: f32[2,24,128], index: 0, kind: input, shape index: {}]
  %s1 = inlined_call_operand.hbm [shape: f32[2,24,128], index: 1, kind: input, shape index: {}]
  %s2 = inlined_call_operand.hbm [shape: f32[2,16,128], index: 2, kind: input, shape index: {}]
  %s3 = inlined_call_operand.hbm [shape: f32[2,16,128], index: 3, kind: input, shape index: {}]
  %s4 = inlined_call_operand.hbm [shape: f32[2,8,128], index: 4, kind: output, shape index: {}]
  %s5 = sld [smem:[#allocation0]]
  $region65: #{tpu_custom_call.1} parent=0
    _
  %s7 = ssub.s32 1, %s5
  %s8 = scalar_select 0, %s7, %s5
  $region1: #{tpu_custom_call.1} parent=0
    #allocation2 [shape = 'u8[24576]{0}', space=vmem, size = 0x6000, scoped, tag = 'input window, operand 0']
    #allocation3 [shape = 's32[2]{0}', space=sflag, size = 0x8, scoped, tag = 'scoped memory for tpu_custom_call.1']
    #allocation4 [shape = 's32[2]{0}', space=sflag, size = 0x8, scoped, tag = 'scoped memory for tpu_custom_call.1']
    #allocation5 [shape = 'u8[24576]{0}', space=vmem, size = 0x6000, scoped, tag = 'input window, operand 1']
    #allocation6 [shape = 's32[2]{0}', space=sflag, size = 0x8, scoped, tag = 'scoped memory for tpu_custom_call.1']
    #allocation7 [shape = 'u8[16384]{0}', space=vmem, size = 0x4000, scoped, tag = 'input window, operand 2']
    #allocation8 [shape = 'u8[16384]{0}', space=vmem, size = 0x4000, scoped, tag = 'input window, operand 3']
    #allocation9 [shape = 's32[2]{0}', space=sflag, size = 0x8, scoped, tag = 'scoped memory for tpu_custom_call.1']
    #allocation10 [shape = 'u8[8192]{0}', space=vmem, size = 0x2000, scoped, tag = 'output window, operand 0']
    %9 = vsyncpa [#allocation3], 0
    %s10 = scalar_lea.sflag [#allocation3], 1
    %11 = vsyncpa %s10, 0
    %12 = vsyncpa [#allocation6], 0
    %s13 = scalar_lea.sflag [#allocation6], 1
    %14 = vsyncpa %s13, 0
    %15 = vsyncpa [#allocation9], 0
    %s16 = scalar_lea.sflag [#allocation9], 1
    %17 = vsyncpa %s16, 0
    %18 = vsyncpa [#allocation4], 0
    %s19 = scalar_lea.sflag [#allocation4], 1
    %20 = vsyncpa %s19, 0
    loop: start=0, step=1, limit=4
    $region2: #{tpu_custom_call.1} parent=1 // loop_pre_header
      _
    $region3: #{tpu_custom_call.1} parent=1 // loop_header
      %s22 = sphi 0, %s26
      %p23 = scmp.ge.s32.totalorder %s22, 4
      %s32 = sphi 0, %s34
      %s35 = sphi 0, %s32
      %s36 = sphi 0, %s35
      %s52 = sphi 0, %s36
      %s58 = sphi 0, %s60
      %s61 = sphi 0, %s58
      %s62 = sphi 0, %s61
      %s78 = sphi 0, %s62
      %s84 = sphi 0, %s86
      %s87 = sphi 0, %s84
      %s88 = sphi 0, %s87
      %s104 = sphi 0, %s88
      %s110 = sphi 0, %s112
      %s113 = sphi 0, %s110
      %s114 = sphi 0, %s113
      %s130 = sphi 0, %s114
      %s136 = sphi 0, %s138
      %s139 = sphi 0, %s136
      %s140 = sphi 0, %s139
      %s156 = sphi 0, %s140
    $region4: #{tpu_custom_call.1} parent=1 // loop_header_branch
      %25 = sbr.rel (%p23) target = $region8
    $region5: #{tpu_custom_call.1} parent=1 // loop_body
      %s27 = ssub.s32 %s22, 1
      %s28 = ssub.s32 %s22, 2
      %s29 = sadd.s32 %s22, 1
      %s30 = ssub.s32 %s22, %s29
      %p31 = scmp.eq.s32.totalorder %s30, 0
      %s33 = sadd.s32 %s32, 1
      %s34 = scalar_select %p31, %s32, %s33
      %p37 = pneg %p31
      %p38 = scmp.eq.s32.totalorder %s22, 1
      %p39 = por %p37, %p38
      %p40 = scmp.ne.s32.totalorder %s32, %s35
      %p41 = scmp.eq.s32.totalorder %s22, 0
      %p42 = por %p40, %p41
      %p43 = scmp.ne.s32.totalorder %s32, %s35
      %p44 = scmp.eq.s32.totalorder %s27, 1
      %p45 = por %p43, %p44
      %p46 = scmp.ne.s32.totalorder %s35, %s36
      %p47 = scmp.eq.s32.totalorder %s27, 0
      %p48 = por %p46, %p47
      %p49 = scmp.ne.s32.totalorder %s35, %s36
      %p50 = scmp.eq.s32.totalorder %s28, 1
      %p51 = por %p49, %p50
      %p53 = scmp.ne.s32.totalorder %s36, %s52
      %p54 = scmp.eq.s32.totalorder %s28, 0
      %p55 = por %p53, %p54
      %s56 = ssub.s32 %s22, %s29
      %p57 = scmp.eq.s32.totalorder %s56, 0
      %s59 = sadd.s32 %s58, 1
      %s60 = scalar_select %p57, %s58, %s59
      %p63 = pneg %p57
      %p64 = scmp.eq.s32.totalorder %s22, 1
      %p65 = por %p63, %p64
      %p66 = scmp.ne.s32.totalorder %s58, %s61
      %p67 = scmp.eq.s32.totalorder %s22, 0
      %p68 = por %p66, %p67
      %p69 = scmp.ne.s32.totalorder %s58, %s61
      %p70 = scmp.eq.s32.totalorder %s27, 1
      %p71 = por %p69, %p70
      %p72 = scmp.ne.s32.totalorder %s61, %s62
      %p73 = scmp.eq.s32.totalorder %s27, 0
      %p74 = por %p72, %p73
      %p75 = scmp.ne.s32.totalorder %s61, %s62
      %p76 = scmp.eq.s32.totalorder %s28, 1
      %p77 = por %p75, %p76
      %p79 = scmp.ne.s32.totalorder %s62, %s78
      %p80 = scmp.eq.s32.totalorder %s28, 0
      %p81 = por %p79, %p80
      %s82 = ssub.s32 %s22, %s29
      %p83 = scmp.eq.s32.totalorder %s82, 0
      %s85 = sadd.s32 %s84, 1
      %s86 = scalar_select %p83, %s84, %s85
      %p89 = pneg %p83
      %p90 = scmp.eq.s32.totalorder %s22, 1
      %p91 = por %p89, %p90
      %p92 = scmp.ne.s32.totalorder %s84, %s87
      %p93 = scmp.eq.s32.totalorder %s22, 0
      %p94 = por %p92, %p93
      %p95 = scmp.ne.s32.totalorder %s84, %s87
      %p96 = scmp.eq.s32.totalorder %s27, 1
      %p97 = por %p95, %p96
      %p98 = scmp.ne.s32.totalorder %s87, %s88
      %p99 = scmp.eq.s32.totalorder %s27, 0
      %p100 = por %p98, %p99
      %p101 = scmp.ne.s32.totalorder %s87, %s88
      %p102 = scmp.eq.s32.totalorder %s28, 1
      %p103 = por %p101, %p102
      %p105 = scmp.ne.s32.totalorder %s88, %s104
      %p106 = scmp.eq.s32.totalorder %s28, 0
      %p107 = por %p105, %p106
      %s108 = ssub.s32 %s22, %s29
      %p109 = scmp.eq.s32.totalorder %s108, 0
      %s111 = sadd.s32 %s110, 1
      %s112 = scalar_select %p109, %s110, %s111
      %p115 = pneg %p109
      %p116 = scmp.eq.s32.totalorder %s22, 1
      %p117 = por %p115, %p116
      %p118 = scmp.ne.s32.totalorder %s110, %s113
      %p119 = scmp.eq.s32.totalorder %s22, 0
      %p120 = por %p118, %p119
      %p121 = scmp.ne.s32.totalorder %s110, %s113
      %p122 = scmp.eq.s32.totalorder %s27, 1
      %p123 = por %p121, %p122
      %p124 = scmp.ne.s32.totalorder %s113, %s114
      %p125 = scmp.eq.s32.totalorder %s27, 0
      %p126 = por %p124, %p125
      %p127 = scmp.ne.s32.totalorder %s113, %s114
      %p128 = scmp.eq.s32.totalorder %s28, 1
      %p129 = por %p127, %p128
      %p131 = scmp.ne.s32.totalorder %s114, %s130
      %p132 = scmp.eq.s32.totalorder %s28, 0
      %p133 = por %p131, %p132
      %s134 = ssub.s32 %s22, %s29
      %p135 = scmp.eq.s32.totalorder %s134, 0
      %s137 = sadd.s32 %s136, 1
      %s138 = scalar_select %p135, %s136, %s137
      %p141 = pneg %p135
      %p142 = scmp.eq.s32.totalorder %s22, 1
      %p143 = por %p141, %p142
      %p144 = scmp.ne.s32.totalorder %s136, %s139
      %p145 = scmp.eq.s32.totalorder %s22, 0
      %p146 = por %p144, %p145
      %p147 = scmp.ne.s32.totalorder %s136, %s139
      %p148 = scmp.eq.s32.totalorder %s27, 1
      %p149 = por %p147, %p148
      %p150 = scmp.ne.s32.totalorder %s139, %s140
      %p151 = scmp.eq.s32.totalorder %s27, 0
      %p152 = por %p150, %p151
      %p153 = scmp.ne.s32.totalorder %s139, %s140
      %p154 = scmp.eq.s32.totalorder %s28, 1
      %p155 = por %p153, %p154
      %p157 = scmp.ne.s32.totalorder %s140, %s156
      %p158 = scmp.eq.s32.totalorder %s28, 0
      %p159 = por %p157, %p158
      %p160 = scmp.le.s32.totalorder 1, %s22
      %p161 = scmp.lt.s32.totalorder %s22, 3
      %p162 = pnand %p160, %p161
      %p163 = pneg %p162
      // Predicated region
      $region9: #{tpu_custom_call.1} parent=5 // pred_check
        _
      $region10: #{tpu_custom_call.1} parent=5 // pred_check_branch
        %165 = sbr.rel (%p162) target = $region12
      $region11: #{tpu_custom_call.1} parent=5 // pred_region
        %s166 = ssub.s32 %s22, 1
      $region12: #{tpu_custom_call.1} parent=5 // pred_fallthru
        _
      %p167 = scmp.lt.s32.totalorder %s22, 2
      // Predicated region
      $region13: #{tpu_custom_call.1} parent=5 // pred_check
        %p168 = pneg %p167
      $region14: #{tpu_custom_call.1} parent=5 // pred_check_branch
        %170 = sbr.rel (%p168) target = $region16
      $region15: #{tpu_custom_call.1} parent=5 // pred_region
        // Predicated region
        $region17: #{tpu_custom_call.1} parent=15 // pred_check
          %p171 = pneg %p42
        $region18: #{tpu_custom_call.1} parent=15 // pred_check_branch
          %173 = sbr.rel (%p171) target = $region20
        $region19: #{tpu_custom_call.1} parent=15 // pred_region
          %s174 = sand.u32 %s32, 1
          %s175 = scalar_lea.sflag [#allocation3], %s174
          %s176 = sand.u32 %s32, 1
          %s177 = smul.addr %s176, 24
          %s178 = scalar_lea.vmem [#allocation2], %s177
          %s180 = ssub.s32 384, 384
          %181 = vsyncadd %s175, %s180
          %s182 = smul.addr %s22, 3
          %s183 = smul.addr %s182, 128
          %s184 = scalar_lea.hbm %s0, %s183
          %s185 = sshll.u32 %s178, 4
          %s186 = int_to_ptr.vmem [resolvable:$true] %s185
          %191 = dma.hbm_to_vmem [thread:$0]  %s184, 384, %s186, %s175, 128, 128, 8
        $region20: #{tpu_custom_call.1} parent=15 // pred_fallthru
          _
        // Predicated region
        $region21: #{tpu_custom_call.1} parent=15 // pred_check
          %p192 = pneg %p68
        $region22: #{tpu_custom_call.1} parent=15 // pred_check_branch
          %194 = sbr.rel (%p192) target = $region24
        $region23: #{tpu_custom_call.1} parent=15 // pred_region
          %s195 = sand.u32 %s22, 1
          %s196 = scalar_lea.sflag [#allocation6], %s195
          %s197 = sand.u32 %s58, 1
          %s198 = smul.addr %s197, 24
          %s199 = scalar_lea.vmem [#allocation5], %s198
          %s201 = ssub.s32 384, 384
          %202 = vsyncadd %s196, %s201
          %s203 = smul.addr %s22, 3
          %s204 = smul.addr %s203, 128
          %s205 = scalar_lea.hbm %s1, %s204
          %s206 = sshll.u32 %s199, 4
          %s207 = int_to_ptr.vmem [resolvable:$true] %s206
          %212 = dma.hbm_to_vmem [thread:$0]  %s205, 384, %s207, %s196, 128, 128, 8
        $region24: #{tpu_custom_call.1} parent=15 // pred_fallthru
          _
        // Predicated region
        $region25: #{tpu_custom_call.1} parent=15 // pred_check
          %p213 = pneg %p94
        $region26: #{tpu_custom_call.1} parent=15 // pred_check_branch
          %215 = sbr.rel (%p213) target = $region28
        $region27: #{tpu_custom_call.1} parent=15 // pred_region
          %s216 = sand.u32 %s22, 1
          %s217 = scalar_lea.sflag [#allocation6], %s216
          %s218 = sand.u32 %s84, 1
          %s219 = smul.addr %s218, 16
          %s220 = scalar_lea.vmem [#allocation7], %s219
          %s222 = ssub.s32 256, 256
          %223 = vsyncadd %s217, %s222
          %s224 = smul.addr %s22, 2
          %s225 = smul.addr %s224, 128
          %s226 = scalar_lea.hbm %s2, %s225
          %s227 = sshll.u32 %s220, 4
          %s228 = int_to_ptr.vmem [resolvable:$true] %s227
          %233 = dma.hbm_to_vmem [thread:$0]  %s226, 256, %s228, %s217, 128, 128, 8
        $region28: #{tpu_custom_call.1} parent=15 // pred_fallthru
          _
        // Predicated region
        $region29: #{tpu_custom_call.1} parent=15 // pred_check
          %p234 = pneg %p120
        $region30: #{tpu_custom_call.1} parent=15 // pred_check_branch
          %236 = sbr.rel (%p234) target = $region32
        $region31: #{tpu_custom_call.1} parent=15 // pred_region
          %s237 = sand.u32 %s110, 1
          %s238 = scalar_lea.sflag [#allocation9], %s237
          %s239 = sand.u32 %s110, 1
          %s240 = smul.addr %s239, 16
          %s241 = scalar_lea.vmem [#allocation8], %s240
          %s243 = ssub.s32 256, 256
          %244 = vsyncadd %s238, %s243
          %s245 = smul.addr %s22, 2
          %s246 = smul.addr %s245, 128
          %s247 = scalar_lea.hbm %s3, %s246
          %s248 = sshll.u32 %s241, 4
          %s249 = int_to_ptr.vmem [resolvable:$true] %s248
          %254 = dma.hbm_to_vmem [thread:$0]  %s247, 256, %s249, %s238, 128, 128, 8
        $region32: #{tpu_custom_call.1} parent=15 // pred_fallthru
          _
      $region16: #{tpu_custom_call.1} parent=5 // pred_fallthru
        _
      %p255 = scmp.le.s32.totalorder 1, %s22
      %p256 = scmp.lt.s32.totalorder %s22, 3
      %p257 = pnand %p255, %p256
      %p258 = pneg %p257
      // Predicated region
      $region33: #{tpu_custom_call.1} parent=5 // pred_check
        _
      $region34: #{tpu_custom_call.1} parent=5 // pred_check_branch
        %260 = sbr.rel (%p257) target = $region36
      $region35: #{tpu_custom_call.1} parent=5 // pred_region
        %s261 = ssub.s32 %s22, 1
        %s262 = sand.u32 %s35, 1
        %s263 = scalar_lea.sflag [#allocation3], %s262
        %s264 = sand.u32 %s35, 1
        %s265 = smul.addr %s264, 24
        %s266 = scalar_lea.vmem [#allocation2], %s265
        // Predicated region
        $region37: #{tpu_custom_call.1} parent=35 // pred_check
          %p267 = pneg %p48
        $region38: #{tpu_custom_call.1} parent=35 // pred_check_branch
          %269 = sbr.rel (%p267) target = $region40
        $region39: #{tpu_custom_call.1} parent=35 // pred_region
          %270 = dma.done %s263, 384
        $region40: #{tpu_custom_call.1} parent=35 // pred_fallthru
          _
        %s271 = sand.u32 %s27, 1
        %s272 = scalar_lea.sflag [#allocation6], %s271
        %s273 = sand.u32 %s61, 1
        %s274 = smul.addr %s273, 24
        %s275 = scalar_lea.vmem [#allocation5], %s274
        // Predicated region
        $region41: #{tpu_custom_call.1} parent=35 // pred_check
          %p276 = pneg %p74
        $region42: #{tpu_custom_call.1} parent=35 // pred_check_branch
          %278 = sbr.rel (%p276) target = $region44
        $region43: #{tpu_custom_call.1} parent=35 // pred_region
          %279 = dma.done %s272, 384
        $region44: #{tpu_custom_call.1} parent=35 // pred_fallthru
          _
        %s280 = sand.u32 %s27, 1
        %s281 = scalar_lea.sflag [#allocation6], %s280
        %s282 = sand.u32 %s87, 1
        %s283 = smul.addr %s282, 16
        %s284 = scalar_lea.vmem [#allocation7], %s283
        // Predicated region
        $region45: #{tpu_custom_call.1} parent=35 // pred_check
          %p285 = pneg %p100
        $region46: #{tpu_custom_call.1} parent=35 // pred_check_branch
          %287 = sbr.rel (%p285) target = $region48
        $region47: #{tpu_custom_call.1} parent=35 // pred_region
          %288 = dma.done %s281, 256
        $region48: #{tpu_custom_call.1} parent=35 // pred_fallthru
          _
        %s289 = sand.u32 %s113, 1
        %s290 = scalar_lea.sflag [#allocation9], %s289
        %s291 = sand.u32 %s113, 1
        %s292 = smul.addr %s291, 16
        %s293 = scalar_lea.vmem [#allocation8], %s292
        // Predicated region
        $region49: #{tpu_custom_call.1} parent=35 // pred_check
          %p294 = pneg %p126
        $region50: #{tpu_custom_call.1} parent=35 // pred_check_branch
          %296 = sbr.rel (%p294) target = $region52
        $region51: #{tpu_custom_call.1} parent=35 // pred_region
          %297 = dma.done %s290, 256
        $region52: #{tpu_custom_call.1} parent=35 // pred_fallthru
          _
        %s298 = sand.u32 %s35, 1
        %s299 = scalar_lea.sflag [#allocation3], %s298
        %s300 = sand.u32 %s35, 1
        %s301 = smul.addr %s300, 24
        %s302 = scalar_lea.vmem [#allocation2], %s301
        %p303 = pneg %p48
        %p304 = pneg %p45
        %s305 = sand.u32 %s27, 1
        %s306 = scalar_lea.sflag [#allocation6], %s305
        %s307 = sand.u32 %s61, 1
        %s308 = smul.addr %s307, 24
        %s309 = scalar_lea.vmem [#allocation5], %s308
        %p310 = pneg %p74
        %p311 = pneg %p71
        %s312 = sand.u32 %s27, 1
        %s313 = scalar_lea.sflag [#allocation6], %s312
        %s314 = sand.u32 %s87, 1
        %s315 = smul.addr %s314, 16
        %s316 = scalar_lea.vmem [#allocation7], %s315
        %p317 = pneg %p100
        %p318 = pneg %p97
        %s319 = sand.u32 %s113, 1
        %s320 = scalar_lea.sflag [#allocation9], %s319
        %s321 = sand.u32 %s113, 1
        %s322 = smul.addr %s321, 16
        %s323 = scalar_lea.vmem [#allocation8], %s322
        %p324 = pneg %p126
        %p325 = pneg %p123
        %p326 = pneg %p152
        %p327 = pneg %p149
        %s328 = sand.u32 %s139, 1
        %s329 = scalar_lea.sflag [#allocation4], %s328
        %s330 = sand.u32 %s139, 1
        %s331 = smul.addr %s330, 8
        %s332 = scalar_lea.vmem [#allocation10], %s331
        %v333 = vld [vmem:[%s266] sm:$0xff]
        %v334 = vld [vmem:[%s266 + $0x8] sm:$0xff]
        %v335 = vld [vmem:[%s266 + $0x10] sm:$0xff]
        %v336 = vld [vmem:[%s275] sm:$0xff]
        %v337 = vld [vmem:[%s275 + $0x8] sm:$0xff]
        %v338 = vld [vmem:[%s275 + $0x10] sm:$0xff]
        %v339 = vsub.f32 %v333, %v336
        %v340 = vsub.f32 %v334, %v337
        %v341 = vsub.f32 %v335, %v338
        %v342 = vand.u32 2147483647, %v339
        %v343 = vand.u32 2147483647, %v340
        %v344 = vand.u32 2147483647, %v341
        %v345 = vadd.f32 %v342, %v343
        %v346 = vadd.f32 %v345, %v344
        %347 = vadd.xlane.f32.xlu0 %v346
        %v348 = vpop.xlane.xlu0 %347
        %v349 = vrot.slane %v348, 4
        %v350 = vadd.f32 %v348, %v349
        %v351 = vrot.slane %v350, 2
        %v352 = vadd.f32 %v350, %v351
        %v353 = vrot.slane %v352, 1
        %v354 = vadd.f32 %v352, %v353
        %s355 = vtos %v354
        %v356 = vstv %s355
        %v357 = vlaneseq
        %v358 = vand.u32 %v357, 127
        %v359 = vlaneseq
        %v360 = vshrl.u32 %v359, 7
        %v361 = vadd.s32 %v360, 8
        %v362 = vadd.s32 %v360, 16
        %363 = vrot.lane.b32.xlu0 %v339, 1
        %v364 = vpop.permute.xlu0 %363
        %365 = vrot.lane.b32.xlu0 %v340, 1
        %v366 = vpop.permute.xlu0 %365
        %367 = vrot.lane.b32.xlu0 %v341, 1
        %v368 = vpop.permute.xlu0 %367
        %369 = vrot.lane.b32.xlu0 %v339, 127
        %v370 = vpop.permute.xlu0 %369
        %371 = vrot.lane.b32.xlu0 %v340, 127
        %v372 = vpop.permute.xlu0 %371
        %373 = vrot.lane.b32.xlu0 %v341, 127
        %v374 = vpop.permute.xlu0 %373
        %v375 = vrot.slane %v339, 7
        %v376 = vrot.slane %v340, 7
        %v377 = vrot.slane %v341, 7
        %vm378 = vcmp.lt.s32.totalorder %v360, 1
        %v379 = vsel %vm378, %v376, %v377
        %v380 = vsel %vm378, %v375, %v376
        %v381 = vsel %vm378, %v377, %v375
        %v382 = vrot.slane %v339, 1
        %v383 = vrot.slane %v340, 1
        %v384 = vrot.slane %v341, 1
        %vm385 = vcmp.lt.s32.totalorder %v360, 7
        %v386 = vsel %vm385, %v383, %v384
        %v387 = vsel %vm385, %v382, %v383
        %v388 = vsel %vm385, %v384, %v382
        %vm389 = vcmp.lt.s32.totalorder %v358, 16
        %v390 = vsub.f32 %v370, %v364
        %v391 = vsub.f32 %v372, %v366
        %v392 = vsub.f32 %v374, %v368
        %v393 = vmul.f32 %v390, 0.5
        %v394 = vmul.f32 %v391, 0.5
        %v395 = vmul.f32 %v392, 0.5
        %v396 = vand.u32 2147483647, %v393
        %v397 = vand.u32 2147483647, %v394
        %v398 = vand.u32 2147483647, %v395
        %v399 = vsel %vm389, %v396, 0.0
        %v400 = vsel %vm389, %v397, 0.0
        %v401 = vsel %vm389, %v398, 0.0
        %vm402 = vcmp.lt.s32.totalorder %v360, 16
        %vm403 = vcmp.lt.s32.totalorder %v361, 16
        %vm404 = vcmp.lt.s32.totalorder %v362, 16
        %v405 = vsub.f32 %v387, %v381
        %v406 = vsub.f32 %v386, %v380
        %v407 = vsub.f32 %v388, %v379
        %v408 = vmul.f32 %v405, 0.5
        %v409 = vmul.f32 %v406, 0.5
        %v410 = vmul.f32 %v407, 0.5
        %v411 = vand.u32 2147483647, %v408
        %v412 = vand.u32 2147483647, %v409
        %v413 = vand.u32 2147483647, %v410
        %v414 = vsel %vm402, %v411, 0.0
        %v415 = vsel %vm403, %v412, 0.0
        %v416 = vsel %vm404, %v413, 0.0
        %v417 = vadd.f32 %v399, %v414
        %v418 = vadd.f32 %v400, %v415
        %v419 = vadd.f32 %v401, %v416
        %v420 = vadd.f32 %v417, %v418
        %v421 = vadd.f32 %v420, %v419
        %422 = vadd.xlane.f32.xlu0 %v421
        %v423 = vpop.xlane.xlu0 %422
        %v424 = vrot.slane %v423, 4
        %v425 = vadd.f32 %v423, %v424
        %v426 = vrot.slane %v425, 2
        %v427 = vadd.f32 %v425, %v426
        %v428 = vrot.slane %v427, 1
        %v429 = vadd.f32 %v427, %v428
        %s430 = vtos %v429
        %v431 = vstv %s430
        %v432 = vmul.f32 %v356, 0.001953125
        %v433 = vadd.f32 %v432, 0.0
        %v434 = vmul.f32 %v431, 1e-05
        %v435 = vadd.f32 %v433, %v434
        %v436 = vld [vmem:[%s284] sm:$0xff]
        %v437 = vld [vmem:[%s284 + $0x8] sm:$0xff]
        %v438 = vld [vmem:[%s293] sm:$0xff]
        %v439 = vld [vmem:[%s293 + $0x8] sm:$0xff]
        %v440 = vsub.f32 %v436, %v438
        %v441 = vsub.f32 %v437, %v439
        %v442 = vand.u32 2147483647, %v440
        %v443 = vand.u32 2147483647, %v441
        %v444 = vadd.f32 %v442, %v443
        %445 = vadd.xlane.f32.xlu0 %v444
        %v446 = vpop.xlane.xlu0 %445
        %v447 = vrot.slane %v446, 4
        %v448 = vadd.f32 %v446, %v447
        %v449 = vrot.slane %v448, 2
        %v450 = vadd.f32 %v448, %v449
        %v451 = vrot.slane %v450, 1
        %v452 = vadd.f32 %v450, %v451
        %s453 = vtos %v452
        %v454 = vstv %s453
        %455 = vrot.lane.b32.xlu0 %v440, 1
        %v456 = vpop.permute.xlu0 %455
        %457 = vrot.lane.b32.xlu0 %v441, 1
        %v458 = vpop.permute.xlu0 %457
        %459 = vrot.lane.b32.xlu0 %v440, 127
        %v460 = vpop.permute.xlu0 %459
        %461 = vrot.lane.b32.xlu0 %v441, 127
        %v462 = vpop.permute.xlu0 %461
        %v463 = vrot.slane %v440, 7
        %v464 = vrot.slane %v441, 7
        %v465 = vsel %vm378, %v463, %v464
        %v466 = vsel %vm378, %v464, %v463
        %v467 = vrot.slane %v440, 1
        %v468 = vrot.slane %v441, 1
        %v469 = vsel %vm385, %v467, %v468
        %v470 = vsel %vm385, %v468, %v467
        %vm471 = vcmp.lt.s32.totalorder %v358, 8
        %v472 = vsub.f32 %v460, %v456
        %v473 = vsub.f32 %v462, %v458
        %v474 = vmul.f32 %v472, 0.5
        %v475 = vmul.f32 %v473, 0.5
        %v476 = vand.u32 2147483647, %v474
        %v477 = vand.u32 2147483647, %v475
        %v478 = vsel %vm471, %v476, 0.0
        %v479 = vsel %vm471, %v477, 0.0
        %vm480 = vcmp.lt.s32.totalorder %v360, 8
        %vm481 = vcmp.lt.s32.totalorder %v361, 8
        %v482 = vsub.f32 %v469, %v466
        %v483 = vsub.f32 %v470, %v465
        %v484 = vmul.f32 %v482, 0.5
        %v485 = vmul.f32 %v483, 0.5
        %v486 = vand.u32 2147483647, %v484
        %v487 = vand.u32 2147483647, %v485
        %v488 = vsel %vm480, %v486, 0.0
        %v489 = vsel %vm481, %v487, 0.0
        %v490 = vadd.f32 %v478, %v488
        %v491 = vadd.f32 %v479, %v489
        %v492 = vadd.f32 %v490, %v491
        %493 = vadd.xlane.f32.xlu0 %v492
        %v494 = vpop.xlane.xlu0 %493
        %v495 = vrot.slane %v494, 4
        %v496 = vadd.f32 %v494, %v495
        %v497 = vrot.slane %v496, 2
        %v498 = vadd.f32 %v496, %v497
        %v499 = vrot.slane %v498, 1
        %v500 = vadd.f32 %v498, %v499
        %s501 = vtos %v500
        %v502 = vstv %s501
        %v503 = vmul.f32 %v454, 0.00390625
        %v504 = vadd.f32 %v435, %v503
        %v505 = vmul.f32 %v502, 5e-06
        %v506 = vadd.f32 %v504, %v505
        %507 = vst [vmem:[%s332] sm:$0xff] %v506
        %s508 = sand.u32 %s139, 1
        %s509 = scalar_lea.sflag [#allocation4], %s508
        %s510 = sand.u32 %s139, 1
        %s511 = smul.addr %s510, 8
        %s512 = scalar_lea.vmem [#allocation10], %s511
        // Predicated region
        $region53: #{tpu_custom_call.1} parent=35 // pred_check
          %p513 = pneg %p149
        $region54: #{tpu_custom_call.1} parent=35 // pred_check_branch
          %515 = sbr.rel (%p513) target = $region56
        $region55: #{tpu_custom_call.1} parent=35 // pred_region
          %s517 = ssub.s32 128, 128
          %518 = vsyncadd %s509, %s517
          %s519 = smul.addr %s27, 128
          %s520 = scalar_lea.hbm %s4, %s519
          %s522 = sshll.u32 %s512, 4
          %s523 = int_to_ptr.vmem [resolvable:$true] %s522
          %525 = dma.vmem_to_hbm [thread:$0]  %s523, 128, %s520, %s509
        $region56: #{tpu_custom_call.1} parent=35 // pred_fallthru
          _
      $region36: #{tpu_custom_call.1} parent=5 // pred_fallthru
        _
      %p526 = scmp.le.s32.totalorder 2, %s22
      // Predicated region
      $region57: #{tpu_custom_call.1} parent=5 // pred_check
        %p527 = pneg %p526
      $region58: #{tpu_custom_call.1} parent=5 // pred_check_branch
        %529 = sbr.rel (%p527) target = $region60
      $region59: #{tpu_custom_call.1} parent=5 // pred_region
        %s530 = ssub.s32 %s22, 2
        // Predicated region
        $region61: #{tpu_custom_call.1} parent=59 // pred_check
          %p531 = pneg %p155
        $region62: #{tpu_custom_call.1} parent=59 // pred_check_branch
          %533 = sbr.rel (%p531) target = $region64
        $region63: #{tpu_custom_call.1} parent=59 // pred_region
          %s534 = sand.u32 %s140, 1
          %s535 = scalar_lea.sflag [#allocation4], %s534
          %s536 = sand.u32 %s140, 1
          %s537 = smul.addr %s536, 8
          %s538 = scalar_lea.vmem [#allocation10], %s537
          %539 = dma.done %s535, 128
        $region64: #{tpu_custom_call.1} parent=59 // pred_fallthru
          _
      $region60: #{tpu_custom_call.1} parent=5 // pred_fallthru
        _
    $region6: #{tpu_custom_call.1} parent=1 // loop_footer
      %s26 = sadd.s32 1, %s22
    $region7: #{tpu_custom_call.1} parent=1 // loop_footer_branch
      %21 = sbr.rel target = $region3
    $region8: #{tpu_custom_call.1} parent=1 // loop_exit
      _
    %540 = vsyncpa [#allocation3], 1
    %s541 = scalar_lea.sflag [#allocation3], 1
    %542 = vsyncpa %s541, 1
    %543 = vsyncpa [#allocation6], 1
    %s544 = scalar_lea.sflag [#allocation6], 1
    %545 = vsyncpa %s544, 1
    %546 = vsyncpa [#allocation9], 1
    %s547 = scalar_lea.sflag [#allocation9], 1
    %548 = vsyncpa %s547, 1
    %549 = vsyncpa [#allocation4], 1
    %s550 = scalar_lea.sflag [#allocation4], 1
    %551 = vsyncpa %s550, 1

</llo_original>
